<compile_context>
chip_gen: v7x
topology: tpu7x:2x2x1
jax: 0.10.0
libtpu: 0.0.40
codegen_flags: <defaults>
</compile_context>

<pallas_src>
import functools

import jax
import jax.numpy as jnp
from jax.experimental import pallas as pl
from jax.experimental.pallas import tpu as pltpu


def _round_up(x: int, m: int) -> int:
    return (x + m - 1) // m * m


# ----------------------------- Pallas kernel --------------------------------
def _lm_head_ce_kernel(hid_ref, wte_ref, lab_ref, logits_ref, nll_ref,
                       m_sc, l_sc, ll_sc, *, v_actual, tv, mask_vocab):
    """One (row-tile, vocab-tile) step: MXU matmul + online-softmax CE update."""
    j = pl.program_id(1)                       # vocab tile index (reduction axis)

    # --- init per-row-tile online-softmax state on the first vocab tile ------
    @pl.when(j == 0)
    def _():
        m_sc[...] = jnp.full_like(m_sc, -jnp.inf)
        l_sc[...] = jnp.zeros_like(l_sc)
        ll_sc[...] = jnp.zeros_like(ll_sc)

    # --- lm_head: (TN, D) @ (TV, D)^T via dot_general contracting on D -------
    # bf16 operands, f32 accumulation; no explicit transpose (MXU-direct).
    logits = jax.lax.dot_general(
        hid_ref[...], wte_ref[...],
        dimension_numbers=(((1,), (1,)), ((), ())),
        preferred_element_type=jnp.float32)    # (TN, TV) f32

    # lane-dense logits writeback for this tile
    logits_ref[...] = logits.astype(logits_ref.dtype)

    # NOTE: labels kept as a tiny (TN, 1) VMEM block (sublane layout matches the
    # per-row broadcast below); the masked load is negligible vs. the matmul.
    labels = lab_ref[...]                      # (TN, 1) int32, -100 = ignore

    # global vocab column index of each lane in this tile
    col = j * tv + jax.lax.broadcasted_iota(jnp.int32, logits.shape, 1)
    if mask_vocab:                             # static branch: only if V was padded
        smax_logits = jnp.where(col < v_actual, logits, -jnp.inf)
    else:
        smax_logits = logits

    # --- online softmax update -----------------------------------------------
    m_prev = m_sc[...]
    m_new = jnp.maximum(m_prev, jnp.max(smax_logits, axis=-1, keepdims=True))
    alpha = jnp.exp(m_prev - m_new)
    p = jnp.exp(smax_logits - m_new)
    l_sc[...] = alpha * l_sc[...] + jnp.sum(p, axis=-1, keepdims=True)
    # gather the label logit inside this vocab tile (one-hot compare on global col)
    ll_sc[...] = ll_sc[...] + jnp.sum(
        jnp.where(col == labels, logits, 0.0), axis=-1, keepdims=True)
    m_sc[...] = m_new

    # --- finalize per-token NLL on the last vocab tile ------------------------
    @pl.when(j == pl.num_programs(1) - 1)
    def _():
        valid = (labels >= 0).astype(jnp.float32)          # ignore_index = -100
        lse = m_sc[...] + jnp.log(l_sc[...])
        nll_ref[...] = ((lse - ll_sc[...]) * valid).astype(nll_ref.dtype)


# ------------------------------ wrapper --------------------------------------
def lm_head_and_loss(hidden, wte, shifted_labels, *, tn=256, tv=1024):
    """hidden: [B,T,D], wte: [V,D], shifted_labels: [B,T] int32 (-100=ignore).

    Returns (logits [B,T,V] f32, mean CE loss scalar f32).
    """
    B, T, D = hidden.shape
    V = wte.shape[0]
    N = B * T

    # tile sizes aligned to (8, 128); clamp to problem size
    TN = _round_up(min(tn, N), 8)
    TV = _round_up(min(tv, V), 128)
    N_pad = _round_up(N, TN)
    V_pad = _round_up(V, TV)

    # bf16 MXU operands (f32 accumulation happens inside the kernel)
    hid2 = hidden.reshape(N, D).astype(jnp.bfloat16)
    wte2 = wte.astype(jnp.bfloat16)
    lab2 = shifted_labels.reshape(N, 1).astype(jnp.int32)

    if N_pad != N:
        hid2 = jnp.pad(hid2, ((0, N_pad - N), (0, 0)))
        lab2 = jnp.pad(lab2, ((0, N_pad - N), (0, 0)), constant_values=-100)
    if V_pad != V:
        wte2 = jnp.pad(wte2, ((0, V_pad - V), (0, 0)))

    grid = (N_pad // TN, V_pad // TV)

    kernel = functools.partial(_lm_head_ce_kernel, v_actual=V, tv=TV,
                               mask_vocab=(V_pad != V))

    # advisory cost estimate for the XLA scheduler
    cost = pl.CostEstimate(
        flops=2 * N_pad * V_pad * D,
        transcendentals=N_pad * V_pad,
        bytes_accessed=(N_pad * D * 2            # hidden (bf16, read once / row tile)
                        + grid[0] * V_pad * D * 2  # wte re-read per row tile (bf16)
                        + N_pad * V_pad * 4        # logits writeback (f32)
                        + N_pad * 4 * 2))          # labels + nll

    # VMEM budget: double-buffered input/output tiles + scratch (+ headroom)
    per_step = (TN * D * 2 + TV * D * 2 + TN * 128 * 4 + TN * TV * 4 + TN * 128 * 4)
    vmem_limit = int(min(max(4 * per_step + 3 * TN * 128 * 4, 16 << 20), 100 << 20))

    logits, nll = pl.pallas_call(
        kernel,
        out_shape=(jax.ShapeDtypeStruct((N_pad, V_pad), jnp.float32),
                   jax.ShapeDtypeStruct((N_pad, 1), jnp.float32)),
        grid_spec=pltpu.PrefetchScalarGridSpec(
            num_scalar_prefetch=0,
            grid=grid,
            in_specs=[
                pl.BlockSpec((TN, D), lambda i, j: (i, 0)),   # hidden row tile
                pl.BlockSpec((TV, D), lambda i, j: (j, 0)),   # wte vocab tile
                pl.BlockSpec((TN, 1), lambda i, j: (i, 0)),   # labels row tile
            ],
            out_specs=(
                pl.BlockSpec((TN, TV), lambda i, j: (i, j)),  # logits tile
                pl.BlockSpec((TN, 1), lambda i, j: (i, 0)),   # per-token nll
            ),
            scratch_shapes=[
                pltpu.VMEM((TN, 1), jnp.float32),   # running max  m
                pltpu.VMEM((TN, 1), jnp.float32),   # running sum  l
                pltpu.VMEM((TN, 1), jnp.float32),   # running label logit
            ]),
        compiler_params=pltpu.CompilerParams(
            dimension_semantics=("parallel", "arbitrary"),
            vmem_limit_bytes=vmem_limit),
        cost_estimate=cost,
    )(hid2, wte2, lab2)

    logits = logits[:N, :V].reshape(B, T, V)
    nll = nll[:N, 0]

    valid = (shifted_labels.reshape(N) >= 0).astype(jnp.float32)
    loss = jnp.sum(nll) / jnp.maximum(jnp.sum(valid), 1.0)   # reduction='mean'
    return logits, loss


# --------------------------- base model (glue) --------------------------------
def base_model_stub(input_ids, wte, wpe, ln_gamma, ln_beta):
    # TODO(synk): the full GPT2 transformer stack of `base_model` is not part of this
    # wrapper; it is approximated by token+position embedding + final LayerNorm
    # to produce `last_hidden_state` (plain JAX glue).
    B, T = input_ids.shape
    h = wte[input_ids] + wpe[jnp.arange(T)][None, :, :]
    mu = jnp.mean(h, axis=-1, keepdims=True)
    var = jnp.var(h, axis=-1, keepdims=True)
    return (h - mu) * jax.lax.rsqrt(var + 1e-5) * ln_gamma + ln_beta


def language_modeling_wrapper_forward(input_ids, labels, params, *, tn=256, tv=1024):
    """Mirrors LanguageModelingWrapper.forward: returns (loss, logits)."""
    hidden = base_model_stub(input_ids, params["wte"], params["wpe"],
                             params["ln_g"], params["ln_b"])
    B, T = input_ids.shape
    # shift: shift_logits = logits[..., :-1, :]; shift_labels = labels[..., 1:]
    # realized as per-position next-token labels with the last position ignored.
    shifted = jnp.concatenate(
        [labels[:, 1:], jnp.full((B, 1), -100, dtype=jnp.int32)], axis=1)
    logits, loss = lm_head_and_loss(hidden, params["wte"], shifted, tn=tn, tv=tv)
    return loss, logits


# ------------------------------- main -----------------------------------------
if __name__ == "__main__":
    B, T, D, V = 2, 64, 128, 512   # small but (8,128)-aligned; grid = (2, 2)

    key = jax.random.PRNGKey(0)
    k_wte, k_wpe, k_ids = jax.random.split(key, 3)

    params = {
        "wte": (jax.random.normal(k_wte, (V, D), jnp.float32) * 0.02),
        "wpe": (jax.random.normal(k_wpe, (T, D), jnp.float32) * 0.01),
        "ln_g": jnp.ones((D,), jnp.float32),
        "ln_b": jnp.zeros((D,), jnp.float32),
    }

    input_ids = jax.random.randint(k_ids, (B, T), 0, V, dtype=jnp.int32)
    labels = input_ids  # standard LM setup: labels == input_ids (shift done inside)

    fwd = jax.jit(functools.partial(language_modeling_wrapper_forward, tn=64, tv=256))
    loss, logits = fwd(input_ids, labels, params)
    loss = jax.block_until_ready(loss)
    logits = jax.block_until_ready(logits)

    # reference check (plain JAX, same bf16-operand / f32-accumulate numerics)
    hidden_ref = base_model_stub(input_ids, params["wte"], params["wpe"],
                                 params["ln_g"], params["ln_b"])
    hid_bf = hidden_ref.astype(jnp.bfloat16).astype(jnp.float32)
    wte_bf = params["wte"].astype(jnp.bfloat16).astype(jnp.float32)
    logits_ref = jnp.einsum("btd,vd->btv", hid_bf, wte_bf)
    shift_logits = logits_ref[:, :-1, :].reshape(-1, V)
    shift_labels = labels[:, 1:].reshape(-1)
    logp = jax.nn.log_softmax(shift_logits, axis=-1)
    loss_ref = -jnp.mean(logp[jnp.arange(shift_labels.shape[0]), shift_labels])

    assert logits.shape == (B, T, V)
    assert jnp.allclose(logits, logits_ref, atol=2e-3, rtol=2e-3)
    assert jnp.allclose(loss, loss_ref, atol=1e-3, rtol=1e-3)

    print("KERNEL_OK")
</pallas_src>

<mosaic_0001>
module attributes {stable_mosaic.version = 11 : i64} {
  func.func @_lm_head_ce_kernel(%arg0: i32, %arg1: i32, %arg2: memref<64x128xbf16, #tpu.memory_space<vmem>>, %arg3: memref<256x128xbf16, #tpu.memory_space<vmem>>, %arg4: memref<64x1xi32, #tpu.memory_space<vmem>>, %arg5: memref<64x256xf32, #tpu.memory_space<vmem>>, %arg6: memref<64x1xf32, #tpu.memory_space<vmem>>, %arg7: memref<64x1xf32, #tpu.memory_space<vmem>>, %arg8: memref<64x1xf32, #tpu.memory_space<vmem>>, %arg9: memref<64x1xf32, #tpu.memory_space<vmem>>) attributes {dimension_semantics = [#tpu.dimension_semantics<parallel>, #tpu.dimension_semantics<arbitrary>], iteration_bounds = array<i64: 2, 2>, scalar_prefetch = 0 : i64, scratch_operands = 3 : i64, tpu.core_type = #tpu.core_type<tc>, window_params = [{transform_indices = @transform_0, window_bounds = array<i64: 64, 128>}, {transform_indices = @transform_1, window_bounds = array<i64: 256, 128>}, {transform_indices = @transform_2, window_bounds = array<i64: 64, 1>}, {transform_indices = @transform_3, window_bounds = array<i64: 64, 256>}, {transform_indices = @transform_4, window_bounds = array<i64: 64, 1>}]} {
    %c0_i32 = arith.constant 0 : i32
    %0 = arith.cmpi eq, %arg1, %c0_i32 : i32
    %1 = arith.extui %0 : i1 to i32
    %c0_i32_0 = arith.constant 0 : i32
    %2 = arith.cmpi ne, %1, %c0_i32_0 : i32
    scf.if %2 {
      %cst_25 = arith.constant 0xFF800000 : f32
      %40 = vector.broadcast %cst_25 : f32 to vector<64x1xf32>
      %c0_26 = arith.constant 0 : index
      %c0_27 = arith.constant 0 : index
      %41 = vector.load %arg7[%c0_26, %c0_27] : memref<64x1xf32, #tpu.memory_space<vmem>>, vector<64x1xf32>
      tpu.vector_store %arg7[%c0_26, %c0_27], %40 {strides = array<i32>} : memref<64x1xf32, #tpu.memory_space<vmem>>, vector<64x1xf32>,
      %cst_28 = arith.constant 0.000000e+00 : f32
      %42 = vector.broadcast %cst_28 : f32 to vector<64x1xf32>
      %c0_29 = arith.constant 0 : index
      %c0_30 = arith.constant 0 : index
      %43 = vector.load %arg8[%c0_29, %c0_30] : memref<64x1xf32, #tpu.memory_space<vmem>>, vector<64x1xf32>
      tpu.vector_store %arg8[%c0_29, %c0_30], %42 {strides = array<i32>} : memref<64x1xf32, #tpu.memory_space<vmem>>, vector<64x1xf32>,
      %cst_31 = arith.constant 0.000000e+00 : f32
      %44 = vector.broadcast %cst_31 : f32 to vector<64x1xf32>
      %c0_32 = arith.constant 0 : index
      %c0_33 = arith.constant 0 : index
      %45 = vector.load %arg9[%c0_32, %c0_33] : memref<64x1xf32, #tpu.memory_space<vmem>>, vector<64x1xf32>
      tpu.vector_store %arg9[%c0_32, %c0_33], %44 {strides = array<i32>} : memref<64x1xf32, #tpu.memory_space<vmem>>, vector<64x1xf32>,
    } else {
    }
    %c0 = arith.constant 0 : index
    %c0_1 = arith.constant 0 : index
    %3 = vector.load %arg2[%c0, %c0_1] : memref<64x128xbf16, #tpu.memory_space<vmem>>, vector<64x128xbf16>
    %c0_2 = arith.constant 0 : index
    %c0_3 = arith.constant 0 : index
    %4 = vector.load %arg3[%c0_2, %c0_3] : memref<256x128xbf16, #tpu.memory_space<vmem>>, vector<256x128xbf16>
    %cst = arith.constant dense<0.000000e+00> : vector<64x256xf32>
    %5 = tpu.matmul %3, %4, %cst {dimension_numbers = #tpu.dot_dimension_numbers<[1], [1], [0], [0], [0, 0, 1, 0], [], []>} : vector<64x128xbf16>, vector<256x128xbf16>, vector<64x256xf32> -> vector<64x256xf32>
    %c0_4 = arith.constant 0 : index
    %c0_5 = arith.constant 0 : index
    %6 = vector.load %arg5[%c0_4, %c0_5] : memref<64x256xf32, #tpu.memory_space<vmem>>, vector<64x256xf32>
    tpu.vector_store %arg5[%c0_4, %c0_5], %5 {strides = array<i32>} : memref<64x256xf32, #tpu.memory_space<vmem>>, vector<64x256xf32>,
    %c0_6 = arith.constant 0 : index
    %c0_7 = arith.constant 0 : index
    %7 = vector.load %arg4[%c0_6, %c0_7] : memref<64x1xi32, #tpu.memory_space<vmem>>, vector<64x1xi32>
    %c256_i32 = arith.constant 256 : i32
    %8 = arith.muli %arg1, %c256_i32 : i32
    %9 = tpu.iota {dimensions = array<i32: 1>} : vector<64x256xi32>
    %10 = vector.broadcast %8 : i32 to vector<64x256xi32>
    %11 = arith.addi %10, %9 : vector<64x256xi32>
    %c0_8 = arith.constant 0 : index
    %c0_9 = arith.constant 0 : index
    %12 = vector.load %arg7[%c0_8, %c0_9] : memref<64x1xf32, #tpu.memory_space<vmem>>, vector<64x1xf32>
    %cst_10 = arith.constant dense<0xFF800000> : vector<64xf32>
    %13 = vector.multi_reduction <maximumf>, %5, %cst_10 [1] : vector<64x256xf32> to vector<64xf32>
    %14 = vector.shape_cast %13 : vector<64xf32> to vector<64x1xf32>
    %15 = arith.maximumf %12, %14 : vector<64x1xf32>
    %16 = arith.subf %12, %15 : vector<64x1xf32>
    %17 = math.exp %16 : vector<64x1xf32>
    %18 = vector.broadcast %15 : vector<64x1xf32> to vector<64x256xf32>
    %19 = arith.subf %5, %18 : vector<64x256xf32>
    %20 = math.exp %19 : vector<64x256xf32>
    %c0_11 = arith.constant 0 : index
    %c0_12 = arith.constant 0 : index
    %21 = vector.load %arg8[%c0_11, %c0_12] : memref<64x1xf32, #tpu.memory_space<vmem>>, vector<64x1xf32>
    %22 = arith.mulf %17, %21 : vector<64x1xf32>
    %cst_13 = arith.constant dense<0.000000e+00> : vector<64xf32>
    %23 = vector.multi_reduction <add>, %20, %cst_13 [1] : vector<64x256xf32> to vector<64xf32>
    %24 = vector.shape_cast %23 : vector<64xf32> to vector<64x1xf32>
    %25 = arith.addf %22, %24 : vector<64x1xf32>
    %c0_14 = arith.constant 0 : index
    %c0_15 = arith.constant 0 : index
    %26 = vector.load %arg8[%c0_14, %c0_15] : memref<64x1xf32, #tpu.memory_space<vmem>>, vector<64x1xf32>
    tpu.vector_store %arg8[%c0_14, %c0_15], %25 {strides = array<i32>} : memref<64x1xf32, #tpu.memory_space<vmem>>, vector<64x1xf32>,
    %c0_16 = arith.constant 0 : index
    %c0_17 = arith.constant 0 : index
    %27 = vector.load %arg9[%c0_16, %c0_17] : memref<64x1xf32, #tpu.memory_space<vmem>>, vector<64x1xf32>
    %28 = vector.broadcast %7 : vector<64x1xi32> to vector<64x256xi32>
    %29 = arith.cmpi eq, %11, %28 : vector<64x256xi32>
    %cst_18 = arith.constant 0.000000e+00 : f32
    %30 = vector.broadcast %cst_18 : f32 to vector<64x256xf32>
    %31 = arith.select %29, %5, %30 : vector<64x256xi1>, vector<64x256xf32>
    %cst_19 = arith.constant dense<0.000000e+00> : vector<64xf32>
    %32 = vector.multi_reduction <add>, %31, %cst_19 [1] : vector<64x256xf32> to vector<64xf32>
    %33 = vector.shape_cast %32 : vector<64xf32> to vector<64x1xf32>
    %34 = arith.addf %27, %33 : vector<64x1xf32>
    %c0_20 = arith.constant 0 : index
    %c0_21 = arith.constant 0 : index
    %35 = vector.load %arg9[%c0_20, %c0_21] : memref<64x1xf32, #tpu.memory_space<vmem>>, vector<64x1xf32>
    tpu.vector_store %arg9[%c0_20, %c0_21], %34 {strides = array<i32>} : memref<64x1xf32, #tpu.memory_space<vmem>>, vector<64x1xf32>,
    %c0_22 = arith.constant 0 : index
    %c0_23 = arith.constant 0 : index
    %36 = vector.load %arg7[%c0_22, %c0_23] : memref<64x1xf32, #tpu.memory_space<vmem>>, vector<64x1xf32>
    tpu.vector_store %arg7[%c0_22, %c0_23], %15 {strides = array<i32>} : memref<64x1xf32, #tpu.memory_space<vmem>>, vector<64x1xf32>,
    %c1_i32 = arith.constant 1 : i32
    %37 = arith.cmpi eq, %arg1, %c1_i32 : i32
    %38 = arith.extui %37 : i1 to i32
    %c0_i32_24 = arith.constant 0 : i32
    %39 = arith.cmpi ne, %38, %c0_i32_24 : i32
    scf.if %39 {
      %c0_i32_25 = arith.constant 0 : i32
      %40 = vector.broadcast %c0_i32_25 : i32 to vector<64x1xi32>
      %41 = arith.cmpi sge, %7, %40 : vector<64x1xi32>
      %42 = arith.extui %41 : vector<64x1xi1> to vector<64x1xi32>
      %43 = arith.sitofp %42 : vector<64x1xi32> to vector<64x1xf32>
      %c0_26 = arith.constant 0 : index
      %c0_27 = arith.constant 0 : index
      %44 = vector.load %arg7[%c0_26, %c0_27] : memref<64x1xf32, #tpu.memory_space<vmem>>, vector<64x1xf32>
      %c0_28 = arith.constant 0 : index
      %c0_29 = arith.constant 0 : index
      %45 = vector.load %arg8[%c0_28, %c0_29] : memref<64x1xf32, #tpu.memory_space<vmem>>, vector<64x1xf32>
      %46 = math.log %45 : vector<64x1xf32>
      %47 = arith.addf %44, %46 : vector<64x1xf32>
      %c0_30 = arith.constant 0 : index
      %c0_31 = arith.constant 0 : index
      %48 = vector.load %arg9[%c0_30, %c0_31] : memref<64x1xf32, #tpu.memory_space<vmem>>, vector<64x1xf32>
      %49 = arith.subf %47, %48 : vector<64x1xf32>
      %50 = arith.mulf %49, %43 : vector<64x1xf32>
      %c0_32 = arith.constant 0 : index
      %c0_33 = arith.constant 0 : index
      %51 = vector.load %arg6[%c0_32, %c0_33] : memref<64x1xf32, #tpu.memory_space<vmem>>, vector<64x1xf32>
      tpu.vector_store %arg6[%c0_32, %c0_33], %50 {strides = array<i32>} : memref<64x1xf32, #tpu.memory_space<vmem>>, vector<64x1xf32>,
    } else {
    }
    return
  }
  func.func @transform_0(%arg0: i32, %arg1: i32) -> (i32, i32) {
    %c0_i32 = arith.constant 0 : i32
    %c0_i32_0 = arith.constant 0 : i32
    return %arg0, %c0_i32 : i32, i32
  }
  func.func @transform_1(%arg0: i32, %arg1: i32) -> (i32, i32) {
    %c0_i32 = arith.constant 0 : i32
    %c0_i32_0 = arith.constant 0 : i32
    return %arg1, %c0_i32 : i32, i32
  }
  func.func @transform_2(%arg0: i32, %arg1: i32) -> (i32, i32) {
    %c0_i32 = arith.constant 0 : i32
    %c0_i32_0 = arith.constant 0 : i32
    return %arg0, %c0_i32 : i32, i32
  }
  func.func @transform_3(%arg0: i32, %arg1: i32) -> (i32, i32) {
    %c0_i32 = arith.constant 0 : i32
    return %arg0, %arg1 : i32, i32
  }
  func.func @transform_4(%arg0: i32, %arg1: i32) -> (i32, i32) {
    %c0_i32 = arith.constant 0 : i32
    %c0_i32_0 = arith.constant 0 : i32
    return %arg0, %c0_i32 : i32, i32
  }
}

</mosaic_0001>

<llo_original>
// kernel: language_modeling_wrapper_forward.1
$region0: #{language_modeling_wrapper_forward.1}
  #allocation0 [shape = 'u32[]', space=smem, size = 0x4, offset = 0x4, fixed_abs, tag = 'smem constant byte address 0x4 - core index']
  #allocation1 [shape = 'u32[144,128]{1,0:T(1,128)}', space=vmem, size = 0x12000, scoped, tag = 'internal scratch']
  #allocation2 [shape = 'f32[64,1]{1,0:T(8,128)}', space=vmem, size = 0x8000, scoped, tag = 'scratch operand']
  #allocation3 [shape = 'f32[64,1]{1,0:T(8,128)}', space=vmem, size = 0x8000, scoped, tag = 'scratch operand']
  #allocation4 [shape = 'f32[64,1]{1,0:T(8,128)}', space=vmem, size = 0x8000, scoped, tag = 'scratch operand']
  %s0 = inlined_call_operand.vmem [shape: bf16[128,128], index: 0, kind: input, shape index: {}]
  %s1 = inlined_call_operand.vmem [shape: bf16[512,128], index: 1, kind: input, shape index: {}]
  %s2 = inlined_call_operand.vmem [shape: s32[128,1], index: 2, kind: input, shape index: {}]
  %s3 = inlined_call_operand.hbm [shape: f32[128,512], index: 3, kind: output, shape index: {0}]
  %s4 = inlined_call_operand.vmem [shape: f32[128,1], index: 4, kind: output, shape index: {1}]
  %5 = xla_tuple %s3, %s4
  %s6 = sld [smem:[#allocation0]]
  $region61: #{language_modeling_wrapper_forward.1} parent=0
    _
  %s8 = ssub.s32 1, %s6
  %s9 = scalar_select 0, %s8, %s6
  $region1: #{language_modeling_wrapper_forward.1} parent=0
    #allocation5 [shape = 'u8[131072]{0}', space=vmem, size = 0x20000, scoped, tag = 'output window, operand 0']
    #allocation6 [shape = 's32[2]{0}', space=sflag, size = 0x8, scoped, tag = 'scoped memory for language_modeling_wrapper_forward.1']
    %10 = vsyncpa [#allocation6], 0
    %s11 = scalar_lea.sflag [#allocation6], 1
    %12 = vsyncpa %s11, 0
    loop: start=0, step=1, limit=6
    $region2: #{language_modeling_wrapper_forward.1} parent=1 // loop_pre_header
      _
    $region3: #{language_modeling_wrapper_forward.1} parent=1 // loop_header
      %s14 = sphi 0, %s18
      %p15 = scmp.ge.s32.totalorder %s14, 6
      %s21 = sphi 0, %s33
      %s22 = sphi 0, %s29
      %s23 = sphi 0, %s21
      %s24 = sphi 0, %s22
      %s25 = sphi 0, %s23
      %s26 = sphi 0, %s24
      %s36 = sphi 0, %s38
      %s39 = sphi 0, %s36
      %s40 = sphi 0, %s39
      %s56 = sphi 0, %s40
      %s62 = sphi 0, %s64
      %s65 = sphi 0, %s62
      %s66 = sphi 0, %s65
      %s82 = sphi 0, %s66
      %s88 = sphi 0, %s90
      %s91 = sphi 0, %s88
      %s92 = sphi 0, %s91
      %s108 = sphi 0, %s92
      %s116 = sphi 0, %s118
      %s119 = sphi 0, %s116
      %s120 = sphi 0, %s119
      %s136 = sphi 0, %s120
      %s142 = sphi 0, %s144
      %s145 = sphi 0, %s142
      %s146 = sphi 0, %s145
      %s162 = sphi 0, %s146
    $region4: #{language_modeling_wrapper_forward.1} parent=1 // loop_header_branch
      %17 = sbr.rel (%p15) target = $region8
    $region5: #{language_modeling_wrapper_forward.1} parent=1 // loop_body
      %s19 = ssub.s32 %s14, 1
      %s20 = ssub.s32 %s14, 2
      %s27 = sadd.s32 1, %s22
      %p28 = scmp.ge.s32.totalorder %s27, 2
      %s29 = scalar_select %p28, 0, %s27
      %s30 = sadd.s32 1, %s21
      %s31 = scalar_select %p28, %s30, %s21
      %p32 = scmp.ge.s32.totalorder %s31, 2
      %s33 = scalar_select %p32, 0, %s31
      %s34 = ssub.s32 %s21, %s33
      %p35 = scmp.eq.s32.totalorder %s34, 0
      %s37 = sadd.s32 %s36, 1
      %s38 = scalar_select %p35, %s36, %s37
      %p41 = pneg %p35
      %p42 = scmp.eq.s32.totalorder %s14, 3
      %p43 = por %p41, %p42
      %p44 = scmp.ne.s32.totalorder %s36, %s39
      %p45 = scmp.eq.s32.totalorder %s14, 0
      %p46 = por %p44, %p45
      %p47 = scmp.ne.s32.totalorder %s36, %s39
      %p48 = scmp.eq.s32.totalorder %s19, 3
      %p49 = por %p47, %p48
      %p50 = scmp.ne.s32.totalorder %s39, %s40
      %p51 = scmp.eq.s32.totalorder %s19, 0
      %p52 = por %p50, %p51
      %p53 = scmp.ne.s32.totalorder %s39, %s40
      %p54 = scmp.eq.s32.totalorder %s20, 3
      %p55 = por %p53, %p54
      %p57 = scmp.ne.s32.totalorder %s40, %s56
      %p58 = scmp.eq.s32.totalorder %s20, 0
      %p59 = por %p57, %p58
      %s60 = ssub.s32 %s22, %s29
      %p61 = scmp.eq.s32.totalorder %s60, 0
      %s63 = sadd.s32 %s62, 1
      %s64 = scalar_select %p61, %s62, %s63
      %p67 = pneg %p61
      %p68 = scmp.eq.s32.totalorder %s14, 3
      %p69 = por %p67, %p68
      %p70 = scmp.ne.s32.totalorder %s62, %s65
      %p71 = scmp.eq.s32.totalorder %s14, 0
      %p72 = por %p70, %p71
      %p73 = scmp.ne.s32.totalorder %s62, %s65
      %p74 = scmp.eq.s32.totalorder %s19, 3
      %p75 = por %p73, %p74
      %p76 = scmp.ne.s32.totalorder %s65, %s66
      %p77 = scmp.eq.s32.totalorder %s19, 0
      %p78 = por %p76, %p77
      %p79 = scmp.ne.s32.totalorder %s65, %s66
      %p80 = scmp.eq.s32.totalorder %s20, 3
      %p81 = por %p79, %p80
      %p83 = scmp.ne.s32.totalorder %s66, %s82
      %p84 = scmp.eq.s32.totalorder %s20, 0
      %p85 = por %p83, %p84
      %s86 = ssub.s32 %s21, %s33
      %p87 = scmp.eq.s32.totalorder %s86, 0
      %s89 = sadd.s32 %s88, 1
      %s90 = scalar_select %p87, %s88, %s89
      %p93 = pneg %p87
      %p94 = scmp.eq.s32.totalorder %s14, 3
      %p95 = por %p93, %p94
      %p96 = scmp.ne.s32.totalorder %s88, %s91
      %p97 = scmp.eq.s32.totalorder %s14, 0
      %p98 = por %p96, %p97
      %p99 = scmp.ne.s32.totalorder %s88, %s91
      %p100 = scmp.eq.s32.totalorder %s19, 3
      %p101 = por %p99, %p100
      %p102 = scmp.ne.s32.totalorder %s91, %s92
      %p103 = scmp.eq.s32.totalorder %s19, 0
      %p104 = por %p102, %p103
      %p105 = scmp.ne.s32.totalorder %s91, %s92
      %p106 = scmp.eq.s32.totalorder %s20, 3
      %p107 = por %p105, %p106
      %p109 = scmp.ne.s32.totalorder %s92, %s108
      %p110 = scmp.eq.s32.totalorder %s20, 0
      %p111 = por %p109, %p110
      %s112 = ssub.s32 %s21, %s33
      %s113 = ssub.s32 %s22, %s29
      %s114 = sor.u32 %s112, %s113
      %p115 = scmp.eq.s32.totalorder %s114, 0
      %s117 = sadd.s32 %s116, 1
      %s118 = scalar_select %p115, %s116, %s117
      %p121 = pneg %p115
      %p122 = scmp.eq.s32.totalorder %s14, 3
      %p123 = por %p121, %p122
      %p124 = scmp.ne.s32.totalorder %s116, %s119
      %p125 = scmp.eq.s32.totalorder %s14, 0
      %p126 = por %p124, %p125
      %p127 = scmp.ne.s32.totalorder %s116, %s119
      %p128 = scmp.eq.s32.totalorder %s19, 3
      %p129 = por %p127, %p128
      %p130 = scmp.ne.s32.totalorder %s119, %s120
      %p131 = scmp.eq.s32.totalorder %s19, 0
      %p132 = por %p130, %p131
      %p133 = scmp.ne.s32.totalorder %s119, %s120
      %p134 = scmp.eq.s32.totalorder %s20, 3
      %p135 = por %p133, %p134
      %p137 = scmp.ne.s32.totalorder %s120, %s136
      %p138 = scmp.eq.s32.totalorder %s20, 0
      %p139 = por %p137, %p138
      %s140 = ssub.s32 %s21, %s33
      %p141 = scmp.eq.s32.totalorder %s140, 0
      %s143 = sadd.s32 %s142, 1
      %s144 = scalar_select %p141, %s142, %s143
      %p147 = pneg %p141
      %p148 = scmp.eq.s32.totalorder %s14, 3
      %p149 = por %p147, %p148
      %p150 = scmp.ne.s32.totalorder %s142, %s145
      %p151 = scmp.eq.s32.totalorder %s14, 0
      %p152 = por %p150, %p151
      %p153 = scmp.ne.s32.totalorder %s142, %s145
      %p154 = scmp.eq.s32.totalorder %s19, 3
      %p155 = por %p153, %p154
      %p156 = scmp.ne.s32.totalorder %s145, %s146
      %p157 = scmp.eq.s32.totalorder %s19, 0
      %p158 = por %p156, %p157
      %p159 = scmp.ne.s32.totalorder %s145, %s146
      %p160 = scmp.eq.s32.totalorder %s20, 3
      %p161 = por %p159, %p160
      %p163 = scmp.ne.s32.totalorder %s146, %s162
      %p164 = scmp.eq.s32.totalorder %s20, 0
      %p165 = por %p163, %p164
      %p166 = scmp.le.s32.totalorder 1, %s14
      %p167 = scmp.lt.s32.totalorder %s14, 5
      %p168 = pnand %p166, %p167
      %p169 = pneg %p168
      // Predicated region
      $region9: #{language_modeling_wrapper_forward.1} parent=5 // pred_check
        _
      $region10: #{language_modeling_wrapper_forward.1} parent=5 // pred_check_branch
        %171 = sbr.rel (%p168) target = $region12
      $region11: #{language_modeling_wrapper_forward.1} parent=5 // pred_region
        %s172 = ssub.s32 %s14, 1
      $region12: #{language_modeling_wrapper_forward.1} parent=5 // pred_fallthru
        _
      %p173 = scmp.lt.s32.totalorder %s14, 4
      // Predicated region
      $region13: #{language_modeling_wrapper_forward.1} parent=5 // pred_check
        %p174 = pneg %p173
      $region14: #{language_modeling_wrapper_forward.1} parent=5 // pred_check_branch
        %176 = sbr.rel (%p174) target = $region16
      $region15: #{language_modeling_wrapper_forward.1} parent=5 // pred_region
        // Predicated region
        $region17: #{language_modeling_wrapper_forward.1} parent=15 // pred_check
          %p177 = pneg %p46
        $region18: #{language_modeling_wrapper_forward.1} parent=15 // pred_check_branch
          %179 = sbr.rel (%p177) target = $region20
        $region19: #{language_modeling_wrapper_forward.1} parent=15 // pred_region
          %s180 = smul.u32 8, %s21
          %p181 = scmp.lt.s32.totalorder %s180, 15
          %s182 = scalar_select %p181, %s180, 15
          %s183 = smul.addr %s182, 4
          %s184 = scalar_lea.vmem %s0, %s183
          %s185 = smul.u32 8, %s21
        $region20: #{language_modeling_wrapper_forward.1} parent=15 // pred_fallthru
          _
        // Predicated region
        $region21: #{language_modeling_wrapper_forward.1} parent=15 // pred_check
          %p186 = pneg %p72
        $region22: #{language_modeling_wrapper_forward.1} parent=15 // pred_check_branch
          %188 = sbr.rel (%p186) target = $region24
        $region23: #{language_modeling_wrapper_forward.1} parent=15 // pred_region
          %s189 = smul.u32 32, %s22
          %p190 = scmp.lt.s32.totalorder %s189, 63
          %s191 = scalar_select %p190, %s189, 63
          %s192 = smul.addr %s191, 4
          %s193 = scalar_lea.vmem %s1, %s192
          %s194 = smul.u32 32, %s22
        $region24: #{language_modeling_wrapper_forward.1} parent=15 // pred_fallthru
          _
        // Predicated region
        $region25: #{language_modeling_wrapper_forward.1} parent=15 // pred_check
          %p195 = pneg %p98
        $region26: #{language_modeling_wrapper_forward.1} parent=15 // pred_check_branch
          %197 = sbr.rel (%p195) target = $region28
        $region27: #{language_modeling_wrapper_forward.1} parent=15 // pred_region
          %s198 = smul.u32 8, %s21
          %p199 = scmp.lt.s32.totalorder %s198, 15
          %s200 = scalar_select %p199, %s198, 15
          %s201 = smul.addr %s200, 8
          %s202 = scalar_lea.vmem %s2, %s201
          %s203 = smul.u32 8, %s21
        $region28: #{language_modeling_wrapper_forward.1} parent=15 // pred_fallthru
          _
      $region16: #{language_modeling_wrapper_forward.1} parent=5 // pred_fallthru
        _
      %p204 = scmp.le.s32.totalorder 1, %s14
      %p205 = scmp.lt.s32.totalorder %s14, 5
      %p206 = pnand %p204, %p205
      %p207 = pneg %p206
      // Predicated region
      $region29: #{language_modeling_wrapper_forward.1} parent=5 // pred_check
        _
      $region30: #{language_modeling_wrapper_forward.1} parent=5 // pred_check_branch
        %209 = sbr.rel (%p206) target = $region32
      $region31: #{language_modeling_wrapper_forward.1} parent=5 // pred_region
        %s210 = ssub.s32 %s14, 1
        %s211 = smul.u32 8, %s23
        %p212 = scmp.lt.s32.totalorder %s211, 15
        %s213 = scalar_select %p212, %s211, 15
        %s214 = smul.addr %s213, 4
        %s215 = scalar_lea.vmem %s0, %s214
        %p216 = pneg %p52
        %p217 = pneg %p49
        %s218 = smul.u32 32, %s24
        %p219 = scmp.lt.s32.totalorder %s218, 63
        %s220 = scalar_select %p219, %s218, 63
        %s221 = smul.addr %s220, 4
        %s222 = scalar_lea.vmem %s1, %s221
        %p223 = pneg %p78
        %p224 = pneg %p75
        %s225 = smul.u32 8, %s23
        %p226 = scmp.lt.s32.totalorder %s225, 15
        %s227 = scalar_select %p226, %s225, 15
        %s228 = smul.addr %s227, 8
        %s229 = scalar_lea.vmem %s2, %s228
        %p230 = pneg %p104
        %p231 = pneg %p101
        %p232 = pneg %p132
        %p233 = pneg %p129
        %s234 = sand.u32 %s119, 1
        %s235 = scalar_lea.sflag [#allocation6], %s234
        %s236 = sand.u32 %s119, 1
        %s237 = smul.addr %s236, 128
        %s238 = scalar_lea.vmem [#allocation5], %s237
        %p239 = pneg %p158
        %p240 = pneg %p155
        %s241 = smul.u32 8, %s23
        %p242 = scmp.lt.s32.totalorder %s241, 15
        %s243 = scalar_select %p242, %s241, 15
        %s244 = smul.addr %s243, 8
        %s245 = scalar_lea.vmem %s4, %s244
        %s246 = smul.u32 8, %s23
        %p247 = scmp.lt.s32.totalorder %s246, 15
        %s248 = scalar_select %p247, %s246, 15
        %s249 = smul.addr %s248, 4
        %s250 = scalar_lea.vmem %s0, %s249
        %s251 = smul.u32 8, %s23
        %s252 = smul.u32 32, %s24
        %p253 = scmp.lt.s32.totalorder %s252, 63
        %s254 = scalar_select %p253, %s252, 63
        %s255 = smul.addr %s254, 4
        %s256 = scalar_lea.vmem %s1, %s255
        %s257 = smul.u32 32, %s24
        %s258 = smul.u32 8, %s23
        %p259 = scmp.lt.s32.totalorder %s258, 15
        %s260 = scalar_select %p259, %s258, 15
        %s261 = smul.addr %s260, 8
        %s262 = scalar_lea.vmem %s2, %s261
        %s263 = smul.u32 8, %s23
        %s264 = smul.u32 8, %s23
        %s265 = smul.u32 2, %s24
        %s266 = smul.u32 8, %s23
        %p267 = scmp.lt.s32.totalorder %s266, 15
        %s268 = scalar_select %p267, %s266, 15
        %s269 = smul.addr %s268, 8
        %s270 = scalar_lea.vmem %s4, %s269
        %s271 = smul.u32 8, %s23
        %p273 = scmp.eq.s32.totalorder %s24, 0
        // Predicated region
        $region33: #{language_modeling_wrapper_forward.1} parent=31 // pred_check
          %p274 = pneg %p273
        $region34: #{language_modeling_wrapper_forward.1} parent=31 // pred_check_branch
          %276 = sbr.rel (%p274) target = $region36
        $region35: #{language_modeling_wrapper_forward.1} parent=31 // pred_region
          %vm277 = vcmask 7168
          %278 = vst.msk [vmem:[#allocation2] sm:$0xff] %vm277, -inf
          %279 = vst.msk [vmem:[#allocation2 + $0x8] sm:$0xff] %vm277, -inf
          %280 = vst.msk [vmem:[#allocation2 + $0x10] sm:$0xff] %vm277, -inf
          %281 = vst.msk [vmem:[#allocation2 + $0x18] sm:$0xff] %vm277, -inf
          %282 = vst.msk [vmem:[#allocation2 + $0x20] sm:$0xff] %vm277, -inf
          %283 = vst.msk [vmem:[#allocation2 + $0x28] sm:$0xff] %vm277, -inf
          %284 = vst.msk [vmem:[#allocation2 + $0x30] sm:$0xff] %vm277, -inf
          %285 = vst.msk [vmem:[#allocation2 + $0x38] sm:$0xff] %vm277, -inf
          %286 = vst.msk [vmem:[#allocation3] sm:$0xff] %vm277, 0.0
          %287 = vst.msk [vmem:[#allocation3 + $0x8] sm:$0xff] %vm277, 0.0
          %288 = vst.msk [vmem:[#allocation3 + $0x10] sm:$0xff] %vm277, 0.0
          %289 = vst.msk [vmem:[#allocation3 + $0x18] sm:$0xff] %vm277, 0.0
          %290 = vst.msk [vmem:[#allocation3 + $0x20] sm:$0xff] %vm277, 0.0
          %291 = vst.msk [vmem:[#allocation3 + $0x28] sm:$0xff] %vm277, 0.0
          %292 = vst.msk [vmem:[#allocation3 + $0x30] sm:$0xff] %vm277, 0.0
          %293 = vst.msk [vmem:[#allocation3 + $0x38] sm:$0xff] %vm277, 0.0
          %294 = vst.msk [vmem:[#allocation4] sm:$0xff] %vm277, 0.0
          %295 = vst.msk [vmem:[#allocation4 + $0x8] sm:$0xff] %vm277, 0.0
          %296 = vst.msk [vmem:[#allocation4 + $0x10] sm:$0xff] %vm277, 0.0
          %297 = vst.msk [vmem:[#allocation4 + $0x18] sm:$0xff] %vm277, 0.0
          %298 = vst.msk [vmem:[#allocation4 + $0x20] sm:$0xff] %vm277, 0.0
          %299 = vst.msk [vmem:[#allocation4 + $0x28] sm:$0xff] %vm277, 0.0
          %300 = vst.msk [vmem:[#allocation4 + $0x30] sm:$0xff] %vm277, 0.0
          %301 = vst.msk [vmem:[#allocation4 + $0x38] sm:$0xff] %vm277, 0.0
        $region36: #{language_modeling_wrapper_forward.1} parent=31 // pred_fallthru
          _
        %v302 = vld [vmem:[%s250] sm:$0xf]
        %v303 = vld [vmem:[%s250 + $0x4] sm:$0xf]
        %v304 = vld [vmem:[%s250 + $0x8] sm:$0xf]
        %v305 = vld [vmem:[%s250 + $0xc] sm:$0xf]
        %v306 = vld [vmem:[%s250 + $0x10] sm:$0xf]
        %v307 = vld [vmem:[%s250 + $0x14] sm:$0xf]
        %v308 = vld [vmem:[%s250 + $0x18] sm:$0xf]
        %v309 = vld [vmem:[%s250 + $0x1c] sm:$0xf]
        %v310 = vld [vmem:[%s256] sm:$0xf]
        %v311 = vld [vmem:[%s256 + $0x4] sm:$0xf]
        %v312 = vld [vmem:[%s256 + $0x8] sm:$0xf]
        %v313 = vld [vmem:[%s256 + $0xc] sm:$0xf]
        %v314 = vld [vmem:[%s256 + $0x10] sm:$0xf]
        %v315 = vld [vmem:[%s256 + $0x14] sm:$0xf]
        %v316 = vld [vmem:[%s256 + $0x18] sm:$0xf]
        %v317 = vld [vmem:[%s256 + $0x1c] sm:$0xf]
        %v318 = vld [vmem:[%s256 + $0x20] sm:$0xf]
        %v319 = vld [vmem:[%s256 + $0x24] sm:$0xf]
        %v320 = vld [vmem:[%s256 + $0x28] sm:$0xf]
        %v321 = vld [vmem:[%s256 + $0x2c] sm:$0xf]
        %v322 = vld [vmem:[%s256 + $0x30] sm:$0xf]
        %v323 = vld [vmem:[%s256 + $0x34] sm:$0xf]
        %v324 = vld [vmem:[%s256 + $0x38] sm:$0xf]
        %v325 = vld [vmem:[%s256 + $0x3c] sm:$0xf]
        %v326 = vld [vmem:[%s256 + $0x40] sm:$0xf]
        %v327 = vld [vmem:[%s256 + $0x44] sm:$0xf]
        %v328 = vld [vmem:[%s256 + $0x48] sm:$0xf]
        %v329 = vld [vmem:[%s256 + $0x4c] sm:$0xf]
        %v330 = vld [vmem:[%s256 + $0x50] sm:$0xf]
        %v331 = vld [vmem:[%s256 + $0x54] sm:$0xf]
        %v332 = vld [vmem:[%s256 + $0x58] sm:$0xf]
        %v333 = vld [vmem:[%s256 + $0x5c] sm:$0xf]
        %v334 = vld [vmem:[%s256 + $0x60] sm:$0xf]
        %v335 = vld [vmem:[%s256 + $0x64] sm:$0xf]
        %v336 = vld [vmem:[%s256 + $0x68] sm:$0xf]
        %v337 = vld [vmem:[%s256 + $0x6c] sm:$0xf]
        %v338 = vld [vmem:[%s256 + $0x70] sm:$0xf]
        %v339 = vld [vmem:[%s256 + $0x74] sm:$0xf]
        %v340 = vld [vmem:[%s256 + $0x78] sm:$0xf]
        %v341 = vld [vmem:[%s256 + $0x7c] sm:$0xf]
        %v350 = vunpack.c.l.b16 %v302
        %v351 = vunpack.c.l.b16 %v303
        %v352 = vunpack.c.l.b16 %v304
        %v353 = vunpack.c.l.b16 %v305
        %v354 = vunpack.c.l.b16 %v306
        %v355 = vunpack.c.l.b16 %v307
        %v356 = vunpack.c.l.b16 %v308
        %v357 = vunpack.c.l.b16 %v309
        %v358 = vpack.c.b16 %v351, %v350
        %v359 = vpack.c.b16 %v353, %v352
        %v360 = vpack.c.b16 %v355, %v354
        %v361 = vpack.c.b16 %v357, %v356
        %v398 = vunpack.c.l.b16 %v310
        %v399 = vunpack.c.l.b16 %v311
        %v400 = vunpack.c.l.b16 %v312
        %v401 = vunpack.c.l.b16 %v313
        %v402 = vunpack.c.l.b16 %v314
        %v403 = vunpack.c.l.b16 %v315
        %v404 = vunpack.c.l.b16 %v316
        %v405 = vunpack.c.l.b16 %v317
        %v406 = vunpack.c.l.b16 %v318
        %v407 = vunpack.c.l.b16 %v319
        %v408 = vunpack.c.l.b16 %v320
        %v409 = vunpack.c.l.b16 %v321
        %v410 = vunpack.c.l.b16 %v322
        %v411 = vunpack.c.l.b16 %v323
        %v412 = vunpack.c.l.b16 %v324
        %v413 = vunpack.c.l.b16 %v325
        %v414 = vunpack.c.l.b16 %v326
        %v415 = vunpack.c.l.b16 %v327
        %v416 = vunpack.c.l.b16 %v328
        %v417 = vunpack.c.l.b16 %v329
        %v418 = vunpack.c.l.b16 %v330
        %v419 = vunpack.c.l.b16 %v331
        %v420 = vunpack.c.l.b16 %v332
        %v421 = vunpack.c.l.b16 %v333
        %v422 = vunpack.c.l.b16 %v334
        %v423 = vunpack.c.l.b16 %v335
        %v424 = vunpack.c.l.b16 %v336
        %v425 = vunpack.c.l.b16 %v337
        %v426 = vunpack.c.l.b16 %v338
        %v427 = vunpack.c.l.b16 %v339
        %v428 = vunpack.c.l.b16 %v340
        %v429 = vunpack.c.l.b16 %v341
        %v430 = vpack.c.b16 %v399, %v398
        %v431 = vpack.c.b16 %v401, %v400
        %v432 = vpack.c.b16 %v403, %v402
        %v433 = vpack.c.b16 %v405, %v404
        %v434 = vpack.c.b16 %v407, %v406
        %v435 = vpack.c.b16 %v409, %v408
        %v436 = vpack.c.b16 %v411, %v410
        %v437 = vpack.c.b16 %v413, %v412
        %v438 = vpack.c.b16 %v415, %v414
        %v439 = vpack.c.b16 %v417, %v416
        %v440 = vpack.c.b16 %v419, %v418
        %v441 = vpack.c.b16 %v421, %v420
        %v442 = vpack.c.b16 %v423, %v422
        %v443 = vpack.c.b16 %v425, %v424
        %v444 = vpack.c.b16 %v427, %v426
        %v445 = vpack.c.b16 %v429, %v428
        %462 = vmatprep.subr.bf16.mxu0 0
        %463 = vmatpush1.bf16.xpose.msra.mxu0 %v430
        %464 = vmatprep.subr.bf16.mxu0 0
        %465 = vmatpush1.bf16.xpose.msra.mxu0 %v431
        %466 = vmatprep.subr.bf16.mxu0 0
        %467 = vmatpush1.bf16.xpose.msra.mxu0 %v432
        %468 = vmatprep.subr.bf16.mxu0 0
        %469 = vmatpush1.bf16.xpose.msra.mxu0 %v433
        %470 = vmatprep.subr.bf16.mxu0 0
        %471 = vmatpush1.bf16.xpose.msra.mxu0 %v434
        %472 = vmatprep.subr.bf16.mxu0 0
        %473 = vmatpush1.bf16.xpose.msra.mxu0 %v435
        %474 = vmatprep.subr.bf16.mxu0 0
        %475 = vmatpush1.bf16.xpose.msra.mxu0 %v436
        %476 = vmatprep.subr.bf16.mxu0 0
        %477 = vmatpush1.bf16.xpose.msra.mxu0 %v437
        %478 = vmatprep.subr.bf16.mxu0 0
        %479 = vmatpush1.bf16.xpose.msra.mxu0 %v438
        %480 = vmatprep.subr.bf16.mxu0 0
        %481 = vmatpush1.bf16.xpose.msra.mxu0 %v439
        %482 = vmatprep.subr.bf16.mxu0 0
        %483 = vmatpush1.bf16.xpose.msra.mxu0 %v440
        %484 = vmatprep.subr.bf16.mxu0 0
        %485 = vmatpush1.bf16.xpose.msra.mxu0 %v441
        %486 = vmatprep.subr.bf16.mxu0 0
        %487 = vmatpush1.bf16.xpose.msra.mxu0 %v442
        %488 = vmatprep.subr.bf16.mxu0 0
        %489 = vmatpush1.bf16.xpose.msra.mxu0 %v443
        %490 = vmatprep.subr.bf16.mxu0 0
        %491 = vmatpush1.bf16.xpose.msra.mxu0 %v444
        %492 = vmatprep.subr.bf16.mxu0 0
        %493 = vmatpush1.bf16.xpose.msra.mxu0 %v445
        %494 = vmatprep.mubr.bf16.mxu0 0
        %495 = vmatmul.mubr.bf16.gmra.mrb[0].mxu0 %v358
        %v496 = vpop.f32.mrb[0].mxu0
        %v497 = vadd.f32 0.0, %v496
        %v498 = vpop.f32.mrb[0].mxu0
        %v499 = vadd.f32 0.0, %v498
        %v500 = vpop.f32.mrb[0].mxu0
        %v501 = vadd.f32 0.0, %v500
        %v502 = vpop.f32.mrb[0].mxu0
        %v503 = vadd.f32 0.0, %v502
        %504 = vmatprep.mubr.bf16.mxu0 0
        %505 = vmatmul.mubr.bf16.gmra.mrb[0].mxu0 %v359
        %v506 = vpop.f32.mrb[0].mxu0
        %v507 = vadd.f32 0.0, %v506
        %v508 = vpop.f32.mrb[0].mxu0
        %v509 = vadd.f32 0.0, %v508
        %v510 = vpop.f32.mrb[0].mxu0
        %v511 = vadd.f32 0.0, %v510
        %v512 = vpop.f32.mrb[0].mxu0
        %v513 = vadd.f32 0.0, %v512
        %514 = vmatprep.mubr.bf16.mxu0 0
        %515 = vmatmul.mubr.bf16.gmra.mrb[0].mxu0 %v360
        %v516 = vpop.f32.mrb[0].mxu0
        %v517 = vadd.f32 0.0, %v516
        %v518 = vpop.f32.mrb[0].mxu0
        %v519 = vadd.f32 0.0, %v518
        %v520 = vpop.f32.mrb[0].mxu0
        %v521 = vadd.f32 0.0, %v520
        %v522 = vpop.f32.mrb[0].mxu0
        %v523 = vadd.f32 0.0, %v522
        %524 = vmatprep.mubr.bf16.mxu0 0
        %525 = vmatmul.mubr.bf16.gmra.mrb[0].mxu0 %v361
        %v526 = vpop.f32.mrb[0].mxu0
        %v527 = vadd.f32 0.0, %v526
        %v528 = vpop.f32.mrb[0].mxu0
        %v529 = vadd.f32 0.0, %v528
        %v530 = vpop.f32.mrb[0].mxu0
        %v531 = vadd.f32 0.0, %v530
        %v532 = vpop.f32.mrb[0].mxu0
        %v533 = vadd.f32 0.0, %v532
        %534 = vdwg.mxu0
        %535 = vst [vmem:[%s238] sm:$0xff] %v497
        %536 = vst [vmem:[%s238 + $0x8] sm:$0xff] %v499
        %537 = vst [vmem:[%s238 + $0x10] sm:$0xff] %v501
        %538 = vst [vmem:[%s238 + $0x18] sm:$0xff] %v503
        %539 = vst [vmem:[%s238 + $0x20] sm:$0xff] %v507
        %540 = vst [vmem:[%s238 + $0x28] sm:$0xff] %v509
        %541 = vst [vmem:[%s238 + $0x30] sm:$0xff] %v511
        %542 = vst [vmem:[%s238 + $0x38] sm:$0xff] %v513
        %543 = vst [vmem:[%s238 + $0x40] sm:$0xff] %v517
        %544 = vst [vmem:[%s238 + $0x48] sm:$0xff] %v519
        %545 = vst [vmem:[%s238 + $0x50] sm:$0xff] %v521
        %546 = vst [vmem:[%s238 + $0x58] sm:$0xff] %v523
        %547 = vst [vmem:[%s238 + $0x60] sm:$0xff] %v527
        %548 = vst [vmem:[%s238 + $0x68] sm:$0xff] %v529
        %549 = vst [vmem:[%s238 + $0x70] sm:$0xff] %v531
        %550 = vst [vmem:[%s238 + $0x78] sm:$0xff] %v533
        %v551 = vld [vmem:[%s262] sm:$0xff]
        %v552 = vld [vmem:[%s262 + $0x8] sm:$0xff]
        %v553 = vld [vmem:[%s262 + $0x10] sm:$0xff]
        %v554 = vld [vmem:[%s262 + $0x18] sm:$0xff]
        %v555 = vld [vmem:[%s262 + $0x20] sm:$0xff]
        %v556 = vld [vmem:[%s262 + $0x28] sm:$0xff]
        %v557 = vld [vmem:[%s262 + $0x30] sm:$0xff]
        %v558 = vld [vmem:[%s262 + $0x38] sm:$0xff]
        %s559 = smul.u32 %s24, 256
        %v560 = vlaneseq
        %v561 = vand.u32 %v560, 127
        %v562 = vadd.s32 %v561, 128
        %v563 = vstv %s559
        %v564 = vadd.s32 %v563, %v561
        %v565 = vadd.s32 %v563, %v562
        %v566 = vld [vmem:[#allocation2] sm:$0xff]
        %v567 = vld [vmem:[#allocation2 + $0x8] sm:$0xff]
        %v568 = vld [vmem:[#allocation2 + $0x10] sm:$0xff]
        %v569 = vld [vmem:[#allocation2 + $0x18] sm:$0xff]
        %v570 = vld [vmem:[#allocation2 + $0x20] sm:$0xff]
        %v571 = vld [vmem:[#allocation2 + $0x28] sm:$0xff]
        %v572 = vld [vmem:[#allocation2 + $0x30] sm:$0xff]
        %v573 = vld [vmem:[#allocation2 + $0x38] sm:$0xff]
        %v574 = vmax.f32 %v497, %v499
        %575 = vmax.xlane.f32.xlu0 %v574
        %v576 = vpop.xlane.xlu0 %575
        %v577 = vmax.f32 %v501, %v503
        %578 = vmax.xlane.f32.xlu0 %v577
        %v579 = vpop.xlane.xlu0 %578
        %v580 = vmax.f32 %v507, %v509
        %581 = vmax.xlane.f32.xlu0 %v580
        %v582 = vpop.xlane.xlu0 %581
        %v583 = vmax.f32 %v511, %v513
        %584 = vmax.xlane.f32.xlu0 %v583
        %v585 = vpop.xlane.xlu0 %584
        %v586 = vmax.f32 %v517, %v519
        %587 = vmax.xlane.f32.xlu0 %v586
        %v588 = vpop.xlane.xlu0 %587
        %v589 = vmax.f32 %v521, %v523
        %590 = vmax.xlane.f32.xlu0 %v589
        %v591 = vpop.xlane.xlu0 %590
        %v592 = vmax.f32 %v527, %v529
        %593 = vmax.xlane.f32.xlu0 %v592
        %v594 = vpop.xlane.xlu0 %593
        %v595 = vmax.f32 %v531, %v533
        %596 = vmax.xlane.f32.xlu0 %v595
        %v597 = vpop.xlane.xlu0 %596
        %v598 = vmax.f32 %v566, %v576
        %v599 = vmax.f32 %v567, %v579
        %v600 = vmax.f32 %v568, %v582
        %v601 = vmax.f32 %v569, %v585
        %v602 = vmax.f32 %v570, %v588
        %v603 = vmax.f32 %v571, %v591
        %v604 = vmax.f32 %v572, %v594
        %v605 = vmax.f32 %v573, %v597
        %v606 = vsub.f32 %v566, %v598
        %v607 = vsub.f32 %v567, %v599
        %v608 = vsub.f32 %v568, %v600
        %v609 = vsub.f32 %v569, %v601
        %v610 = vsub.f32 %v570, %v602
        %v611 = vsub.f32 %v571, %v603
        %v612 = vsub.f32 %v572, %v604
        %v613 = vsub.f32 %v573, %v605
        %v614 = vmul.f32 %v606, 1.442695
        %v615 = vpow.pop %v614
        %v616 = vmul.f32 %v607, 1.442695
        %v617 = vpow.pop %v616
        %v618 = vmul.f32 %v608, 1.442695
        %v619 = vpow.pop %v618
        %v620 = vmul.f32 %v609, 1.442695
        %v621 = vpow.pop %v620
        %v622 = vmul.f32 %v610, 1.442695
        %v623 = vpow.pop %v622
        %v624 = vmul.f32 %v611, 1.442695
        %v625 = vpow.pop %v624
        %v626 = vmul.f32 %v612, 1.442695
        %v627 = vpow.pop %v626
        %v628 = vmul.f32 %v613, 1.442695
        %v629 = vpow.pop %v628
        %631 = vset.pattern.permute.xlu0 0
        %632 = vperm.xlu0 %631, %v598
        %v633 = vpop.permute.xlu0 %632
        %636 = vset.pattern.permute.xlu0 0
        %637 = vperm.xlu0 %636, %v599
        %v638 = vpop.permute.xlu0 %637
        %641 = vset.pattern.permute.xlu0 0
        %642 = vperm.xlu0 %641, %v600
        %v643 = vpop.permute.xlu0 %642
        %646 = vset.pattern.permute.xlu0 0
        %647 = vperm.xlu0 %646, %v601
        %v648 = vpop.permute.xlu0 %647
        %651 = vset.pattern.permute.xlu0 0
        %652 = vperm.xlu0 %651, %v602
        %v653 = vpop.permute.xlu0 %652
        %656 = vset.pattern.permute.xlu0 0
        %657 = vperm.xlu0 %656, %v603
        %v658 = vpop.permute.xlu0 %657
        %661 = vset.pattern.permute.xlu0 0
        %662 = vperm.xlu0 %661, %v604
        %v663 = vpop.permute.xlu0 %662
        %666 = vset.pattern.permute.xlu0 0
        %667 = vperm.xlu0 %666, %v605
        %v668 = vpop.permute.xlu0 %667
        %v670 = vsub.f32 %v497, %v633
        %v671 = vsub.f32 %v499, %v633
        %v672 = vsub.f32 %v501, %v638
        %v673 = vsub.f32 %v503, %v638
        %v674 = vsub.f32 %v507, %v643
        %v675 = vsub.f32 %v509, %v643
        %v676 = vsub.f32 %v511, %v648
        %v677 = vsub.f32 %v513, %v648
        %v678 = vsub.f32 %v517, %v653
        %v679 = vsub.f32 %v519, %v653
        %v680 = vsub.f32 %v521, %v658
        %v681 = vsub.f32 %v523, %v658
        %v682 = vsub.f32 %v527, %v663
        %v683 = vsub.f32 %v529, %v663
        %v684 = vsub.f32 %v531, %v668
        %v685 = vsub.f32 %v533, %v668
        %v686 = vmul.f32 %v670, 1.442695
        %v687 = vpow.pop %v686
        %v688 = vmul.f32 %v671, 1.442695
        %v689 = vpow.pop %v688
        %v690 = vmul.f32 %v672, 1.442695
        %v691 = vpow.pop %v690
        %v692 = vmul.f32 %v673, 1.442695
        %v693 = vpow.pop %v692
        %v694 = vmul.f32 %v674, 1.442695
        %v695 = vpow.pop %v694
        %v696 = vmul.f32 %v675, 1.442695
        %v697 = vpow.pop %v696
        %v698 = vmul.f32 %v676, 1.442695
        %v699 = vpow.pop %v698
        %v700 = vmul.f32 %v677, 1.442695
        %v701 = vpow.pop %v700
        %v702 = vmul.f32 %v678, 1.442695
        %v703 = vpow.pop %v702
        %v704 = vmul.f32 %v679, 1.442695
        %v705 = vpow.pop %v704
        %v706 = vmul.f32 %v680, 1.442695
        %v707 = vpow.pop %v706
        %v708 = vmul.f32 %v681, 1.442695
        %v709 = vpow.pop %v708
        %v710 = vmul.f32 %v682, 1.442695
        %v711 = vpow.pop %v710
        %v712 = vmul.f32 %v683, 1.442695
        %v713 = vpow.pop %v712
        %v714 = vmul.f32 %v684, 1.442695
        %v715 = vpow.pop %v714
        %v716 = vmul.f32 %v685, 1.442695
        %v717 = vpow.pop %v716
        %v718 = vld [vmem:[#allocation3] sm:$0xff]
        %v719 = vld [vmem:[#allocation3 + $0x8] sm:$0xff]
        %v720 = vld [vmem:[#allocation3 + $0x10] sm:$0xff]
        %v721 = vld [vmem:[#allocation3 + $0x18] sm:$0xff]
        %v722 = vld [vmem:[#allocation3 + $0x20] sm:$0xff]
        %v723 = vld [vmem:[#allocation3 + $0x28] sm:$0xff]
        %v724 = vld [vmem:[#allocation3 + $0x30] sm:$0xff]
        %v725 = vld [vmem:[#allocation3 + $0x38] sm:$0xff]
        %v726 = vmul.f32 %v615, %v718
        %v727 = vmul.f32 %v617, %v719
        %v728 = vmul.f32 %v619, %v720
        %v729 = vmul.f32 %v621, %v721
        %v730 = vmul.f32 %v623, %v722
        %v731 = vmul.f32 %v625, %v723
        %v732 = vmul.f32 %v627, %v724
        %v733 = vmul.f32 %v629, %v725
        %v734 = vadd.f32 %v687, %v689
        %735 = vadd.xlane.f32.xlu0 %v734
        %v736 = vpop.xlane.xlu0 %735
        %v737 = vadd.f32 %v691, %v693
        %738 = vadd.xlane.f32.xlu0 %v737
        %v739 = vpop.xlane.xlu0 %738
        %v740 = vadd.f32 %v695, %v697
        %741 = vadd.xlane.f32.xlu0 %v740
        %v742 = vpop.xlane.xlu0 %741
        %v743 = vadd.f32 %v699, %v701
        %744 = vadd.xlane.f32.xlu0 %v743
        %v745 = vpop.xlane.xlu0 %744
        %v746 = vadd.f32 %v703, %v705
        %747 = vadd.xlane.f32.xlu0 %v746
        %v748 = vpop.xlane.xlu0 %747
        %v749 = vadd.f32 %v707, %v709
        %750 = vadd.xlane.f32.xlu0 %v749
        %v751 = vpop.xlane.xlu0 %750
        %v752 = vadd.f32 %v711, %v713
        %753 = vadd.xlane.f32.xlu0 %v752
        %v754 = vpop.xlane.xlu0 %753
        %v755 = vadd.f32 %v715, %v717
        %756 = vadd.xlane.f32.xlu0 %v755
        %v757 = vpop.xlane.xlu0 %756
        %v758 = vadd.f32 %v726, %v736
        %v759 = vadd.f32 %v727, %v739
        %v760 = vadd.f32 %v728, %v742
        %v761 = vadd.f32 %v729, %v745
        %v762 = vadd.f32 %v730, %v748
        %v763 = vadd.f32 %v731, %v751
        %v764 = vadd.f32 %v732, %v754
        %v765 = vadd.f32 %v733, %v757
        %vm766 = vcmask 7168
        %767 = vst.msk [vmem:[#allocation3] sm:$0xff] %vm766, %v758
        %768 = vst.msk [vmem:[#allocation3 + $0x8] sm:$0xff] %vm766, %v759
        %769 = vst.msk [vmem:[#allocation3 + $0x10] sm:$0xff] %vm766, %v760
        %770 = vst.msk [vmem:[#allocation3 + $0x18] sm:$0xff] %vm766, %v761
        %771 = vst.msk [vmem:[#allocation3 + $0x20] sm:$0xff] %vm766, %v762
        %772 = vst.msk [vmem:[#allocation3 + $0x28] sm:$0xff] %vm766, %v763
        %773 = vst.msk [vmem:[#allocation3 + $0x30] sm:$0xff] %vm766, %v764
        %774 = vst.msk [vmem:[#allocation3 + $0x38] sm:$0xff] %vm766, %v765
        %v775 = vld [vmem:[#allocation4] sm:$0xff]
        %v776 = vld [vmem:[#allocation4 + $0x8] sm:$0xff]
        %v777 = vld [vmem:[#allocation4 + $0x10] sm:$0xff]
        %v778 = vld [vmem:[#allocation4 + $0x18] sm:$0xff]
        %v779 = vld [vmem:[#allocation4 + $0x20] sm:$0xff]
        %v780 = vld [vmem:[#allocation4 + $0x28] sm:$0xff]
        %v781 = vld [vmem:[#allocation4 + $0x30] sm:$0xff]
        %v782 = vld [vmem:[#allocation4 + $0x38] sm:$0xff]
        %783 = vset.pattern.permute.xlu0 0
        %784 = vperm.xlu0 %783, %v551
        %v785 = vpop.permute.xlu0 %784
        %786 = vset.pattern.permute.xlu0 0
        %787 = vperm.xlu0 %786, %v552
        %v788 = vpop.permute.xlu0 %787
        %789 = vset.pattern.permute.xlu0 0
        %790 = vperm.xlu0 %789, %v553
        %v791 = vpop.permute.xlu0 %790
        %792 = vset.pattern.permute.xlu0 0
        %793 = vperm.xlu0 %792, %v554
        %v794 = vpop.permute.xlu0 %793
        %795 = vset.pattern.permute.xlu0 0
        %796 = vperm.xlu0 %795, %v555
        %v797 = vpop.permute.xlu0 %796
        %798 = vset.pattern.permute.xlu0 0
        %799 = vperm.xlu0 %798, %v556
        %v800 = vpop.permute.xlu0 %799
        %801 = vset.pattern.permute.xlu0 0
        %802 = vperm.xlu0 %801, %v557
        %v803 = vpop.permute.xlu0 %802
        %804 = vset.pattern.permute.xlu0 0
        %805 = vperm.xlu0 %804, %v558
        %v806 = vpop.permute.xlu0 %805
        %vm807 = vcmp.eq.s32.totalorder %v564, %v785
        %vm808 = vcmp.eq.s32.totalorder %v565, %v785
        %vm809 = vcmp.eq.s32.totalorder %v564, %v788
        %vm810 = vcmp.eq.s32.totalorder %v565, %v788
        %vm811 = vcmp.eq.s32.totalorder %v564, %v791
        %vm812 = vcmp.eq.s32.totalorder %v565, %v791
        %vm813 = vcmp.eq.s32.totalorder %v564, %v794
        %vm814 = vcmp.eq.s32.totalorder %v565, %v794
        %vm815 = vcmp.eq.s32.totalorder %v564, %v797
        %vm816 = vcmp.eq.s32.totalorder %v565, %v797
        %vm817 = vcmp.eq.s32.totalorder %v564, %v800
        %vm818 = vcmp.eq.s32.totalorder %v565, %v800
        %vm819 = vcmp.eq.s32.totalorder %v564, %v803
        %vm820 = vcmp.eq.s32.totalorder %v565, %v803
        %vm821 = vcmp.eq.s32.totalorder %v564, %v806
        %vm822 = vcmp.eq.s32.totalorder %v565, %v806
        %v823 = vsel %vm807, %v497, 0.0
        %v824 = vsel %vm808, %v499, 0.0
        %v825 = vsel %vm809, %v501, 0.0
        %v826 = vsel %vm810, %v503, 0.0
        %v827 = vsel %vm811, %v507, 0.0
        %v828 = vsel %vm812, %v509, 0.0
        %v829 = vsel %vm813, %v511, 0.0
        %v830 = vsel %vm814, %v513, 0.0
        %v831 = vsel %vm815, %v517, 0.0
        %v832 = vsel %vm816, %v519, 0.0
        %v833 = vsel %vm817, %v521, 0.0
        %v834 = vsel %vm818, %v523, 0.0
        %v835 = vsel %vm819, %v527, 0.0
        %v836 = vsel %vm820, %v529, 0.0
        %v837 = vsel %vm821, %v531, 0.0
        %v838 = vsel %vm822, %v533, 0.0
        %v839 = vadd.f32 %v823, %v824
        %840 = vadd.xlane.f32.xlu0 %v839
        %v841 = vpop.xlane.xlu0 %840
        %v842 = vadd.f32 %v825, %v826
        %843 = vadd.xlane.f32.xlu0 %v842
        %v844 = vpop.xlane.xlu0 %843
        %v845 = vadd.f32 %v827, %v828
        %846 = vadd.xlane.f32.xlu0 %v845
        %v847 = vpop.xlane.xlu0 %846
        %v848 = vadd.f32 %v829, %v830
        %849 = vadd.xlane.f32.xlu0 %v848
        %v850 = vpop.xlane.xlu0 %849
        %v851 = vadd.f32 %v831, %v832
        %852 = vadd.xlane.f32.xlu0 %v851
        %v853 = vpop.xlane.xlu0 %852
        %v854 = vadd.f32 %v833, %v834
        %855 = vadd.xlane.f32.xlu0 %v854
        %v856 = vpop.xlane.xlu0 %855
        %v857 = vadd.f32 %v835, %v836
        %858 = vadd.xlane.f32.xlu0 %v857
        %v859 = vpop.xlane.xlu0 %858
        %v860 = vadd.f32 %v837, %v838
        %861 = vadd.xlane.f32.xlu0 %v860
        %v862 = vpop.xlane.xlu0 %861
        %v863 = vadd.f32 %v775, %v841
        %v864 = vadd.f32 %v776, %v844
        %v865 = vadd.f32 %v777, %v847
        %v866 = vadd.f32 %v778, %v850
        %v867 = vadd.f32 %v779, %v853
        %v868 = vadd.f32 %v780, %v856
        %v869 = vadd.f32 %v781, %v859
        %v870 = vadd.f32 %v782, %v862
        %871 = vst.msk [vmem:[#allocation4] sm:$0xff] %vm766, %v863
        %872 = vst.msk [vmem:[#allocation4 + $0x8] sm:$0xff] %vm766, %v864
        %873 = vst.msk [vmem:[#allocation4 + $0x10] sm:$0xff] %vm766, %v865
        %874 = vst.msk [vmem:[#allocation4 + $0x18] sm:$0xff] %vm766, %v866
        %875 = vst.msk [vmem:[#allocation4 + $0x20] sm:$0xff] %vm766, %v867
        %876 = vst.msk [vmem:[#allocation4 + $0x28] sm:$0xff] %vm766, %v868
        %877 = vst.msk [vmem:[#allocation4 + $0x30] sm:$0xff] %vm766, %v869
        %878 = vst.msk [vmem:[#allocation4 + $0x38] sm:$0xff] %vm766, %v870
        %879 = vst.msk [vmem:[#allocation2] sm:$0xff] %vm766, %v598
        %880 = vst.msk [vmem:[#allocation2 + $0x8] sm:$0xff] %vm766, %v599
        %881 = vst.msk [vmem:[#allocation2 + $0x10] sm:$0xff] %vm766, %v600
        %882 = vst.msk [vmem:[#allocation2 + $0x18] sm:$0xff] %vm766, %v601
        %883 = vst.msk [vmem:[#allocation2 + $0x20] sm:$0xff] %vm766, %v602
        %884 = vst.msk [vmem:[#allocation2 + $0x28] sm:$0xff] %vm766, %v603
        %885 = vst.msk [vmem:[#allocation2 + $0x30] sm:$0xff] %vm766, %v604
        %886 = vst.msk [vmem:[#allocation2 + $0x38] sm:$0xff] %vm766, %v605
        %p887 = scmp.eq.s32.totalorder %s24, 1
        // Predicated region
        $region37: #{language_modeling_wrapper_forward.1} parent=31 // pred_check
          %p888 = pneg %p887
        $region38: #{language_modeling_wrapper_forward.1} parent=31 // pred_check_branch
          %890 = sbr.rel (%p888) target = $region40
        $region39: #{language_modeling_wrapper_forward.1} parent=31 // pred_region
          %vm891 = vcmp.ge.s32.totalorder %v551, 0
          %vm892 = vcmp.ge.s32.totalorder %v552, 0
          %vm893 = vcmp.ge.s32.totalorder %v553, 0
          %vm894 = vcmp.ge.s32.totalorder %v554, 0
          %vm895 = vcmp.ge.s32.totalorder %v555, 0
          %vm896 = vcmp.ge.s32.totalorder %v556, 0
          %vm897 = vcmp.ge.s32.totalorder %v557, 0
          %vm898 = vcmp.ge.s32.totalorder %v558, 0
          %v899 = vsel %vm891, 1, 0
          %v900 = vsel %vm892, 1, 0
          %v901 = vsel %vm893, 1, 0
          %v902 = vsel %vm894, 1, 0
          %v903 = vsel %vm895, 1, 0
          %v904 = vsel %vm896, 1, 0
          %v905 = vsel %vm897, 1, 0
          %v906 = vsel %vm898, 1, 0
          %v907 = vcvt.s32.f32 %v899
          %v908 = vcvt.s32.f32 %v900
          %v909 = vcvt.s32.f32 %v901
          %v910 = vcvt.s32.f32 %v902
          %v911 = vcvt.s32.f32 %v903
          %v912 = vcvt.s32.f32 %v904
          %v913 = vcvt.s32.f32 %v905
          %v914 = vcvt.s32.f32 %v906
          %v915 = vld [vmem:[#allocation2] sm:$0xff]
          %v916 = vld [vmem:[#allocation2 + $0x8] sm:$0xff]
          %v917 = vld [vmem:[#allocation2 + $0x10] sm:$0xff]
          %v918 = vld [vmem:[#allocation2 + $0x18] sm:$0xff]
          %v919 = vld [vmem:[#allocation2 + $0x20] sm:$0xff]
          %v920 = vld [vmem:[#allocation2 + $0x28] sm:$0xff]
          %v921 = vld [vmem:[#allocation2 + $0x30] sm:$0xff]
          %v922 = vld [vmem:[#allocation2 + $0x38] sm:$0xff]
          %v923 = vld [vmem:[#allocation3] sm:$0xff]
          %v924 = vld [vmem:[#allocation3 + $0x8] sm:$0xff]
          %v925 = vld [vmem:[#allocation3 + $0x10] sm:$0xff]
          %v926 = vld [vmem:[#allocation3 + $0x18] sm:$0xff]
          %v927 = vld [vmem:[#allocation3 + $0x20] sm:$0xff]
          %v928 = vld [vmem:[#allocation3 + $0x28] sm:$0xff]
          %v929 = vld [vmem:[#allocation3 + $0x30] sm:$0xff]
          %v930 = vld [vmem:[#allocation3 + $0x38] sm:$0xff]
          %v931 = vlog2.pop %v923
          %v932 = vmul.f32 %v931, 0.6931472
          %v933 = vlog2.pop %v924
          %v934 = vmul.f32 %v933, 0.6931472
          %v935 = vlog2.pop %v925
          %v936 = vmul.f32 %v935, 0.6931472
          %v937 = vlog2.pop %v926
          %v938 = vmul.f32 %v937, 0.6931472
          %v939 = vlog2.pop %v927
          %v940 = vmul.f32 %v939, 0.6931472
          %v941 = vlog2.pop %v928
          %v942 = vmul.f32 %v941, 0.6931472
          %v943 = vlog2.pop %v929
          %v944 = vmul.f32 %v943, 0.6931472
          %v945 = vlog2.pop %v930
          %v946 = vmul.f32 %v945, 0.6931472
          %v947 = vadd.f32 %v915, %v932
          %v948 = vadd.f32 %v916, %v934
          %v949 = vadd.f32 %v917, %v936
          %v950 = vadd.f32 %v918, %v938
          %v951 = vadd.f32 %v919, %v940
          %v952 = vadd.f32 %v920, %v942
          %v953 = vadd.f32 %v921, %v944
          %v954 = vadd.f32 %v922, %v946
          %v955 = vld [vmem:[#allocation4] sm:$0xff]
          %v956 = vld [vmem:[#allocation4 + $0x8] sm:$0xff]
          %v957 = vld [vmem:[#allocation4 + $0x10] sm:$0xff]
          %v958 = vld [vmem:[#allocation4 + $0x18] sm:$0xff]
          %v959 = vld [vmem:[#allocation4 + $0x20] sm:$0xff]
          %v960 = vld [vmem:[#allocation4 + $0x28] sm:$0xff]
          %v961 = vld [vmem:[#allocation4 + $0x30] sm:$0xff]
          %v962 = vld [vmem:[#allocation4 + $0x38] sm:$0xff]
          %v963 = vsub.f32 %v947, %v955
          %v964 = vsub.f32 %v948, %v956
          %v965 = vsub.f32 %v949, %v957
          %v966 = vsub.f32 %v950, %v958
          %v967 = vsub.f32 %v951, %v959
          %v968 = vsub.f32 %v952, %v960
          %v969 = vsub.f32 %v953, %v961
          %v970 = vsub.f32 %v954, %v962
          %v971 = vmul.f32 %v963, %v907
          %v972 = vmul.f32 %v964, %v908
          %v973 = vmul.f32 %v965, %v909
          %v974 = vmul.f32 %v966, %v910
          %v975 = vmul.f32 %v967, %v911
          %v976 = vmul.f32 %v968, %v912
          %v977 = vmul.f32 %v969, %v913
          %v978 = vmul.f32 %v970, %v914
          %979 = vst.msk [vmem:[%s270] sm:$0xff] %vm766, %v971
          %980 = vst.msk [vmem:[%s270 + $0x8] sm:$0xff] %vm766, %v972
          %981 = vst.msk [vmem:[%s270 + $0x10] sm:$0xff] %vm766, %v973
          %982 = vst.msk [vmem:[%s270 + $0x18] sm:$0xff] %vm766, %v974
          %983 = vst.msk [vmem:[%s270 + $0x20] sm:$0xff] %vm766, %v975
          %984 = vst.msk [vmem:[%s270 + $0x28] sm:$0xff] %vm766, %v976
          %985 = vst.msk [vmem:[%s270 + $0x30] sm:$0xff] %vm766, %v977
          %986 = vst.msk [vmem:[%s270 + $0x38] sm:$0xff] %vm766, %v978
        $region40: #{language_modeling_wrapper_forward.1} parent=31 // pred_fallthru
          _
        %s987 = sand.u32 %s119, 1
        %s988 = scalar_lea.sflag [#allocation6], %s987
        %s989 = sand.u32 %s119, 1
        %s990 = smul.addr %s989, 128
        %s991 = scalar_lea.vmem [#allocation5], %s990
        %s992 = smul.u32 8, %s23
        %p993 = scmp.lt.s32.totalorder %s992, 15
        %s994 = scalar_select %p993, %s992, 15
        %s995 = smul.addr %s994, 8
        %s996 = scalar_lea.vmem %s4, %s995
        // Predicated region
        $region41: #{language_modeling_wrapper_forward.1} parent=31 // pred_check
          %p997 = pneg %p129
        $region42: #{language_modeling_wrapper_forward.1} parent=31 // pred_check_branch
          %999 = sbr.rel (%p997) target = $region44
        $region43: #{language_modeling_wrapper_forward.1} parent=31 // pred_region
          %s1000 = smul.u32 8, %s23
          %s1001 = smul.u32 2, %s24
          %s1003 = ssub.s32 2048, 2048
          %1004 = vsyncadd %s988, %s1003
          %s1005 = smul.addr %s1000, 4
          %s1006 = sadd.s32 %s1001, %s1005
          %s1007 = smul.addr %s1006, 128
          %s1008 = scalar_lea.hbm %s3, %s1007
          %s1009 = sshll.u32 %s991, 4
          %s1010 = int_to_ptr.vmem [resolvable:$true] %s1009
          %1015 = dma.vmem_to_hbm [thread:$0]  %s1010, 2048, %s1008, %s988, 256, 512, 16
        $region44: #{language_modeling_wrapper_forward.1} parent=31 // pred_fallthru
          _
        // Predicated region
        $region45: #{language_modeling_wrapper_forward.1} parent=31 // pred_check
          %p1016 = pneg %p155
        $region46: #{language_modeling_wrapper_forward.1} parent=31 // pred_check_branch
          %1018 = sbr.rel (%p1016) target = $region48
        $region47: #{language_modeling_wrapper_forward.1} parent=31 // pred_region
          %s1019 = smul.u32 8, %s23
        $region48: #{language_modeling_wrapper_forward.1} parent=31 // pred_fallthru
          _
      $region32: #{language_modeling_wrapper_forward.1} parent=5 // pred_fallthru
        _
      %p1020 = scmp.le.s32.totalorder 2, %s14
      // Predicated region
      $region49: #{language_modeling_wrapper_forward.1} parent=5 // pred_check
        %p1021 = pneg %p1020
      $region50: #{language_modeling_wrapper_forward.1} parent=5 // pred_check_branch
        %1023 = sbr.rel (%p1021) target = $region52
      $region51: #{language_modeling_wrapper_forward.1} parent=5 // pred_region
        %s1024 = ssub.s32 %s14, 2
        // Predicated region
        $region53: #{language_modeling_wrapper_forward.1} parent=51 // pred_check
          %p1025 = pneg %p135
        $region54: #{language_modeling_wrapper_forward.1} parent=51 // pred_check_branch
          %1027 = sbr.rel (%p1025) target = $region56
        $region55: #{language_modeling_wrapper_forward.1} parent=51 // pred_region
          %s1028 = sand.u32 %s120, 1
          %s1029 = scalar_lea.sflag [#allocation6], %s1028
          %s1030 = sand.u32 %s120, 1
          %s1031 = smul.addr %s1030, 128
          %s1032 = scalar_lea.vmem [#allocation5], %s1031
          %1033 = dma.done %s1029, 2048
        $region56: #{language_modeling_wrapper_forward.1} parent=51 // pred_fallthru
          _
        // Predicated region
        $region57: #{language_modeling_wrapper_forward.1} parent=51 // pred_check
          %p1034 = pneg %p161
        $region58: #{language_modeling_wrapper_forward.1} parent=51 // pred_check_branch
          %1036 = sbr.rel (%p1034) target = $region60
        $region59: #{language_modeling_wrapper_forward.1} parent=51 // pred_region
          %s1037 = smul.u32 8, %s25
          %p1038 = scmp.lt.s32.totalorder %s1037, 15
          %s1039 = scalar_select %p1038, %s1037, 15
          %s1040 = smul.addr %s1039, 8
          %s1041 = scalar_lea.vmem %s4, %s1040
        $region60: #{language_modeling_wrapper_forward.1} parent=51 // pred_fallthru
          _
      $region52: #{language_modeling_wrapper_forward.1} parent=5 // pred_fallthru
        _
    $region6: #{language_modeling_wrapper_forward.1} parent=1 // loop_footer
      %s18 = sadd.s32 1, %s14
    $region7: #{language_modeling_wrapper_forward.1} parent=1 // loop_footer_branch
      %13 = sbr.rel target = $region3
    $region8: #{language_modeling_wrapper_forward.1} parent=1 // loop_exit
      _
    %1042 = vsyncpa [#allocation6], 1
    %s1043 = scalar_lea.sflag [#allocation6], 1
    %1044 = vsyncpa %s1043, 1

</llo_original>
